<compile_context>
chip_gen: v5e
topology: v5e:2x2
jax: 0.10.0
libtpu: 0.0.40
codegen_flags: <defaults>
</compile_context>

<pallas_src>
import jax
import jax.numpy as jnp
import numpy as np
from jax import lax
from jax.experimental import pallas as pl
from jax.experimental.pallas import tpu as pltpu

BN_EPS = 1e-5


def _im2col_3x3(a, H, W):
    """a: (C, H*W) activation, spatial flattened on the lane axis.

    Returns the (9*C, H*W) im2col slab for a 3x3 / stride-1 / pad-1 conv, rows
    ordered tap-major ((dh, dw) row-major), channel-minor, with out-of-image
    taps zeroed.  Built entirely in registers: static slices of a zero-extended
    copy handle the row (H) halo, column masks handle the W halo.
    """
    C, S = a.shape
    halo = W + 1                                    # max |flattened shift| = W+1
    zpad = jnp.zeros((C, halo), a.dtype)
    ap = jnp.concatenate([zpad, a, zpad], axis=1)   # (C, S + 2*(W+1))

    col = lax.broadcasted_iota(jnp.int32, (1, S), 1) % W
    not_left = col >= 1                             # tap column w-1 exists
    not_right = col <= W - 2                        # tap column w+1 exists

    taps = []
    for oh in (-1, 0, 1):
        for ow in (-1, 0, 1):
            d = oh * W + ow
            t = ap[:, halo + d: halo + d + S]       # value at (h+oh, w+ow);
            if ow == -1:                            # row overruns already zero.
                t = jnp.where(not_left, t, 0.0)
            elif ow == 1:
                t = jnp.where(not_right, t, 0.0)
            taps.append(t)
    return jnp.concatenate(taps, axis=0)            # (9*C, S)


def _make_block_kernel(H, W, C, P, mm_dtype):
    S = H * W

    def kernel(x_ref, w1_ref, w2_ref, aff_ref, o_ref):
        x = x_ref[0]                                # (C, S) f32
        aff = aff_ref[...]                          # (P, 4) f32: [s1 b1 s2 b2]
        s1, b1 = aff[:, 0:1], aff[:, 1:2]
        s2, b2 = aff[:, 2:3], aff[:, 3:4]

        # ---- conv1: one MXU matmul, bf16 operands, f32 accumulation ----
        p1 = _im2col_3x3(x, H, W).astype(mm_dtype)                  # (9C, S)
        y1 = jnp.dot(w1_ref[...], p1, preferred_element_type=jnp.float32)
        h = jnp.maximum(y1 * s1 + b1, 0.0)                          # bn1 + relu1 (f32)

        # ---- conv2 on the hidden activation (stays in registers) ----
        p2 = _im2col_3x3(h, H, W).astype(mm_dtype)                  # (9P, S)
        y2 = jnp.dot(w2_ref[...], p2, preferred_element_type=jnp.float32)
        res = y2 * s2 + b2                                          # bn2 (f32)

        # ---- identity skip (downsample=None) + relu2, lane-dense store ----
        o_ref[...] = jnp.maximum(x + res, 0.0).reshape(1, P, S)

    return kernel


def basic_block_forward(x_nchw, params, mm_dtype=jnp.bfloat16):
    """Eval-mode forward of BasicBlockWithDeathRate (stride=1, downsample=None)."""
    (w1, g1, be1, m1, v1, w2, g2, be2, m2, v2) = params

    # Fold BatchNorm running stats into per-channel affine (exact eval math).
    s1 = g1 / jnp.sqrt(v1 + BN_EPS)
    b1 = be1 - m1 * s1
    s2 = g2 / jnp.sqrt(v2 + BN_EPS)
    b2 = be2 - m2 * s2

    N, C, H, W = x_nchw.shape
    P = w1.shape[0]
    if C != P:
        raise ValueError("identity skip (downsample=None) requires inplanes == planes")
    S = H * W

    # Lane-dense layout: NCHW -> (N, C, H*W); spatial sits on the 128-lane axis.
    x_flat = x_nchw.reshape(N, C, S).astype(jnp.float32)

    # PyTorch conv weight (out, in, 3, 3) -> (out, 3, 3, in) -> (out, 9*in),
    # matching the tap-major / channel-minor im2col row order.
    w1m = jnp.transpose(w1, (0, 2, 3, 1)).reshape(P, 9 * C).astype(mm_dtype)
    w2m = jnp.transpose(w2, (0, 2, 3, 1)).reshape(P, 9 * P).astype(mm_dtype)
    aff = jnp.stack([s1, b1, s2, b2], axis=1).astype(jnp.float32)   # (P, 4)

    kernel = _make_block_kernel(H, W, C, P, mm_dtype)

    # Advisory cost + explicit VMEM budget (actual usage here is ~tens of KiB;
    # the limit stays far below every generation's physical VMEM).
    flops = int(N * S * (2 * P * 9 * C + 2 * P * 9 * P + 6 * P))
    bytes_accessed = int(4 * (x_flat.size + N * P * S + aff.size)
                         + 2 * (w1m.size + w2m.size))
    bytes_per_step = 4 * (C * S + P * S + aff.size) + 2 * (w1m.size + w2m.size)
    vmem_limit = int(max(16 * 1024 * 1024, 8 * bytes_per_step))

    out = pl.pallas_call(
        kernel,
        out_shape=jax.ShapeDtypeStruct((N, P, S), jnp.float32),
        grid_spec=pltpu.PrefetchScalarGridSpec(
            num_scalar_prefetch=0,
            grid=(N,),                    # batch on a parallel axis (2 TCs on v7x)
            in_specs=[
                pl.BlockSpec((1, C, S), lambda n: (n, 0, 0)),
                pl.BlockSpec((P, 9 * C), lambda n: (0, 0)),
                pl.BlockSpec((P, 9 * P), lambda n: (0, 0)),
                pl.BlockSpec((P, 4), lambda n: (0, 0)),
            ],
            out_specs=pl.BlockSpec((1, P, S), lambda n: (n, 0, 0)),
        ),
        compiler_params=pltpu.CompilerParams(
            dimension_semantics=("parallel",),
            vmem_limit_bytes=vmem_limit,
        ),
        cost_estimate=pl.CostEstimate(flops=flops, transcendentals=0,
                                      bytes_accessed=bytes_accessed),
    )(x_flat, w1m, w2m, aff)

    return out.reshape(N, P, H, W)        # back to NCHW (metadata-only reshape)


def reference_forward(x_nchw, params, conv_dtype=jnp.float32):
    """Pure-JAX reference (lax.conv).  conv_dtype=bfloat16 mirrors the kernel's
    mixed-precision matmul operands (f32 accumulation) for a tight check."""
    (w1, g1, be1, m1, v1, w2, g2, be2, m2, v2) = params
    inv1 = g1 / jnp.sqrt(v1 + BN_EPS)
    inv2 = g2 / jnp.sqrt(v2 + BN_EPS)
    s1 = inv1.reshape(1, -1, 1, 1)
    b1 = (be1 - m1 * inv1).reshape(1, -1, 1, 1)
    s2 = inv2.reshape(1, -1, 1, 1)
    b2 = (be2 - m2 * inv2).reshape(1, -1, 1, 1)

    x = x_nchw.astype(jnp.float32)
    dn = ("NCHW", "OIHW", "NCHW")
    r = lax.conv_general_dilated(x.astype(conv_dtype), w1.astype(conv_dtype),
                                 (1, 1), "SAME", dimension_numbers=dn,
                                 preferred_element_type=jnp.float32)
    r = jnp.maximum(r * s1 + b1, 0.0)
    r = lax.conv_general_dilated(r.astype(conv_dtype), w2.astype(conv_dtype),
                                 (1, 1), "SAME", dimension_numbers=dn,
                                 preferred_element_type=jnp.float32)
    r = r * s2 + b2
    return jnp.maximum(x + r, 0.0)


def make_params(key, inplanes, planes):
    ks = jax.random.split(key, 8)
    fan1 = inplanes * 9
    fan2 = planes * 9
    w1 = jax.random.normal(ks[0], (planes, inplanes, 3, 3), jnp.float32) / np.sqrt(fan1)
    w2 = jax.random.normal(ks[1], (planes, planes, 3, 3), jnp.float32) / np.sqrt(fan2)
    g1 = jax.random.uniform(ks[2], (planes,), jnp.float32, 0.7, 1.3)
    be1 = 0.1 * jax.random.normal(ks[3], (planes,), jnp.float32)
    m1 = 0.1 * jax.random.normal(ks[4], (planes,), jnp.float32)
    v1 = jax.random.uniform(ks[5], (planes,), jnp.float32, 0.7, 1.3)
    g2 = jax.random.uniform(ks[6], (planes,), jnp.float32, 0.7, 1.3)
    be2 = 0.1 * jax.random.normal(ks[7], (planes,), jnp.float32)
    m2 = 0.05 * jnp.ones((planes,), jnp.float32)
    v2 = jnp.full((planes,), 0.9, jnp.float32)
    return (w1, g1, be1, m1, v1, w2, g2, be2, m2, v2)


if __name__ == "__main__":
    # TODO(synk): training-mode stochastic depth (host-side torch.rand gate and the
    # 1/(1-death_rate) rescale) and the stride>1 / downsample variants are not
    # implemented; this is the deterministic eval-mode forward (stride=1, no
    # downsample), which matches the PyTorch module exactly (no eval-time rescale).
    key = jax.random.PRNGKey(0)
    k_x, k_p = jax.random.split(key)

    N, C, H, W = 2, 4, 16, 16              # inplanes = planes = 4, stride = 1
    x = jax.random.normal(k_x, (N, C, H, W), jnp.float32)
    params = make_params(k_p, C, C)

    fwd = jax.jit(basic_block_forward)
    out = jax.block_until_ready(fwd(x, params))

    # Tight check vs. a reference mirroring the kernel's bf16-operand /
    # f32-accumulate matmuls, plus a looser check vs. full-f32 module math
    # (tolerance accounts for bf16 operand rounding, as flagged in the review).
    ref_mixed = reference_forward(x, params, conv_dtype=jnp.bfloat16)
    ref_fp32 = reference_forward(x, params, conv_dtype=jnp.float32)
    np.testing.assert_allclose(np.asarray(out), np.asarray(ref_mixed),
                               rtol=1e-2, atol=1e-2)
    np.testing.assert_allclose(np.asarray(out), np.asarray(ref_fp32),
                               rtol=5e-2, atol=5e-2)
    print("KERNEL_OK")
</pallas_src>

<mosaic_0001>
module attributes {stable_mosaic.version = 11 : i64} {
  func.func @kernel(%arg0: i32, %arg1: memref<1x4x256xf32, #tpu.memory_space<vmem>>, %arg2: memref<4x36xbf16, #tpu.memory_space<vmem>>, %arg3: memref<4x36xbf16, #tpu.memory_space<vmem>>, %arg4: memref<4x4xf32, #tpu.memory_space<vmem>>, %arg5: memref<1x4x256xf32, #tpu.memory_space<vmem>>) attributes {dimension_semantics = [#tpu.dimension_semantics<parallel>], iteration_bounds = array<i64: 2>, scalar_prefetch = 0 : i64, scratch_operands = 0 : i64, tpu.core_type = #tpu.core_type<tc>, window_params = [{transform_indices = @transform_0, window_bounds = array<i64: 1, 4, 256>}, {pipeline_mode = #tpu.pipeline_mode<synchronous>, transform_indices = @transform_1, window_bounds = array<i64: 4, 36>}, {pipeline_mode = #tpu.pipeline_mode<synchronous>, transform_indices = @transform_2, window_bounds = array<i64: 4, 36>}, {pipeline_mode = #tpu.pipeline_mode<synchronous>, transform_indices = @transform_3, window_bounds = array<i64: 4, 4>}, {transform_indices = @transform_4, window_bounds = array<i64: 1, 4, 256>}]} {
    %c0 = arith.constant 0 : index
    %c0_0 = arith.constant 0 : index
    %c0_1 = arith.constant 0 : index
    %0 = vector.load %arg1[%c0, %c0_0, %c0_1] : memref<1x4x256xf32, #tpu.memory_space<vmem>>, vector<1x4x256xf32>
    %1 = vector.shape_cast %0 : vector<1x4x256xf32> to vector<4x256xf32>
    %c0_2 = arith.constant 0 : index
    %c0_3 = arith.constant 0 : index
    %2 = vector.load %arg4[%c0_2, %c0_3] : memref<4x4xf32, #tpu.memory_space<vmem>>, vector<4x4xf32>
    %3 = vector.extract_strided_slice %2 {offsets = [0, 0], sizes = [4, 1], strides = [1, 1]} : vector<4x4xf32> to vector<4x1xf32>
    %4 = vector.extract_strided_slice %2 {offsets = [0, 1], sizes = [4, 1], strides = [1, 1]} : vector<4x4xf32> to vector<4x1xf32>
    %5 = vector.extract_strided_slice %2 {offsets = [0, 2], sizes = [4, 1], strides = [1, 1]} : vector<4x4xf32> to vector<4x1xf32>
    %6 = vector.extract_strided_slice %2 {offsets = [0, 3], sizes = [4, 1], strides = [1, 1]} : vector<4x4xf32> to vector<4x1xf32>
    %cst = arith.constant 0.000000e+00 : f32
    %7 = vector.broadcast %cst : f32 to vector<4x17xf32>
    %8 = tpu.concatenate %7, %1, %7 in 1 : vector<4x17xf32>, vector<4x256xf32>, vector<4x17xf32> -> vector<4x290xf32>
    %9 = tpu.iota {dimensions = array<i32: 1>} : vector<1x256xi32>
    %c16_i32 = arith.constant 16 : i32
    %c0_i32 = arith.constant 0 : i32
    %10 = arith.cmpi eq, %c16_i32, %c0_i32 : i32
    %c1_i32 = arith.constant 1 : i32
    %11 = arith.select %10, %c1_i32, %c16_i32 : i32
    %12 = vector.broadcast %11 : i32 to vector<1x256xi32>
    %13 = arith.remsi %9, %12 : vector<1x256xi32>
    %c0_i32_4 = arith.constant 0 : i32
    %14 = vector.broadcast %c0_i32_4 : i32 to vector<1x256xi32>
    %15 = arith.cmpi ne, %13, %14 : vector<1x256xi32>
    %c0_i32_5 = arith.constant 0 : i32
    %16 = vector.broadcast %c0_i32_5 : i32 to vector<1x256xi32>
    %17 = arith.cmpi slt, %13, %16 : vector<1x256xi32>
    %c0_i32_6 = arith.constant 0 : i32
    %18 = arith.cmpi slt, %11, %c0_i32_6 : i32
    %19 = vector.broadcast %18 : i1 to vector<1x256xi1>
    %20 = vector.broadcast %19 : vector<1x256xi1> to vector<1x256xi1>
    %21 = arith.xori %17, %20 : vector<1x256xi1>
    %22 = arith.andi %21, %15 : vector<1x256xi1>
    %23 = vector.broadcast %11 : i32 to vector<1x256xi32>
    %24 = arith.addi %13, %23 : vector<1x256xi32>
    %25 = arith.select %22, %24, %13 : vector<1x256xi1>, vector<1x256xi32>
    %c1_i32_7 = arith.constant 1 : i32
    %26 = vector.broadcast %c1_i32_7 : i32 to vector<1x256xi32>
    %27 = arith.cmpi sge, %25, %26 : vector<1x256xi32>
    %c14_i32 = arith.constant 14 : i32
    %28 = vector.broadcast %c14_i32 : i32 to vector<1x256xi32>
    %29 = arith.cmpi sle, %25, %28 : vector<1x256xi32>
    %30 = vector.extract_strided_slice %8 {offsets = [0, 0], sizes = [4, 256], strides = [1, 1]} : vector<4x290xf32> to vector<4x256xf32>
    %cst_8 = arith.constant 0.000000e+00 : f32
    %31 = vector.shape_cast %27 : vector<1x256xi1> to vector<1x256xi1>
    %32 = vector.broadcast %31 : vector<1x256xi1> to vector<4x256xi1>
    %33 = vector.broadcast %cst_8 : f32 to vector<4x256xf32>
    %34 = arith.select %32, %30, %33 : vector<4x256xi1>, vector<4x256xf32>
    %35 = vector.extract_strided_slice %8 {offsets = [0, 1], sizes = [4, 256], strides = [1, 1]} : vector<4x290xf32> to vector<4x256xf32>
    %36 = vector.extract_strided_slice %8 {offsets = [0, 2], sizes = [4, 256], strides = [1, 1]} : vector<4x290xf32> to vector<4x256xf32>
    %cst_9 = arith.constant 0.000000e+00 : f32
    %37 = vector.shape_cast %29 : vector<1x256xi1> to vector<1x256xi1>
    %38 = vector.broadcast %37 : vector<1x256xi1> to vector<4x256xi1>
    %39 = vector.broadcast %cst_9 : f32 to vector<4x256xf32>
    %40 = arith.select %38, %36, %39 : vector<4x256xi1>, vector<4x256xf32>
    %41 = vector.extract_strided_slice %8 {offsets = [0, 16], sizes = [4, 256], strides = [1, 1]} : vector<4x290xf32> to vector<4x256xf32>
    %cst_10 = arith.constant 0.000000e+00 : f32
    %42 = vector.shape_cast %27 : vector<1x256xi1> to vector<1x256xi1>
    %43 = vector.broadcast %42 : vector<1x256xi1> to vector<4x256xi1>
    %44 = vector.broadcast %cst_10 : f32 to vector<4x256xf32>
    %45 = arith.select %43, %41, %44 : vector<4x256xi1>, vector<4x256xf32>
    %46 = vector.extract_strided_slice %8 {offsets = [0, 17], sizes = [4, 256], strides = [1, 1]} : vector<4x290xf32> to vector<4x256xf32>
    %47 = vector.extract_strided_slice %8 {offsets = [0, 18], sizes = [4, 256], strides = [1, 1]} : vector<4x290xf32> to vector<4x256xf32>
    %cst_11 = arith.constant 0.000000e+00 : f32
    %48 = vector.shape_cast %29 : vector<1x256xi1> to vector<1x256xi1>
    %49 = vector.broadcast %48 : vector<1x256xi1> to vector<4x256xi1>
    %50 = vector.broadcast %cst_11 : f32 to vector<4x256xf32>
    %51 = arith.select %49, %47, %50 : vector<4x256xi1>, vector<4x256xf32>
    %52 = vector.extract_strided_slice %8 {offsets = [0, 32], sizes = [4, 256], strides = [1, 1]} : vector<4x290xf32> to vector<4x256xf32>
    %cst_12 = arith.constant 0.000000e+00 : f32
    %53 = vector.shape_cast %27 : vector<1x256xi1> to vector<1x256xi1>
    %54 = vector.broadcast %53 : vector<1x256xi1> to vector<4x256xi1>
    %55 = vector.broadcast %cst_12 : f32 to vector<4x256xf32>
    %56 = arith.select %54, %52, %55 : vector<4x256xi1>, vector<4x256xf32>
    %57 = vector.extract_strided_slice %8 {offsets = [0, 33], sizes = [4, 256], strides = [1, 1]} : vector<4x290xf32> to vector<4x256xf32>
    %58 = vector.extract_strided_slice %8 {offsets = [0, 34], sizes = [4, 256], strides = [1, 1]} : vector<4x290xf32> to vector<4x256xf32>
    %cst_13 = arith.constant 0.000000e+00 : f32
    %59 = vector.shape_cast %29 : vector<1x256xi1> to vector<1x256xi1>
    %60 = vector.broadcast %59 : vector<1x256xi1> to vector<4x256xi1>
    %61 = vector.broadcast %cst_13 : f32 to vector<4x256xf32>
    %62 = arith.select %60, %58, %61 : vector<4x256xi1>, vector<4x256xf32>
    %63 = tpu.concatenate %34, %35, %40, %45, %46, %51, %56, %57, %62 in 0 : vector<4x256xf32>, vector<4x256xf32>, vector<4x256xf32>, vector<4x256xf32>, vector<4x256xf32>, vector<4x256xf32>, vector<4x256xf32>, vector<4x256xf32>, vector<4x256xf32> -> vector<36x256xf32>
    %64 = arith.truncf %63 : vector<36x256xf32> to vector<36x256xbf16>
    %c0_14 = arith.constant 0 : index
    %c0_15 = arith.constant 0 : index
    %65 = vector.load %arg2[%c0_14, %c0_15] : memref<4x36xbf16, #tpu.memory_space<vmem>>, vector<4x36xbf16>
    %cst_16 = arith.constant dense<0.000000e+00> : vector<4x256xf32>
    %66 = tpu.matmul %65, %64, %cst_16 {dimension_numbers = #tpu.dot_dimension_numbers<[1], [0], [0], [1], [0, 0, 1, 1], [], []>} : vector<4x36xbf16>, vector<36x256xbf16>, vector<4x256xf32> -> vector<4x256xf32>
    %67 = vector.broadcast %3 : vector<4x1xf32> to vector<4x256xf32>
    %68 = arith.mulf %66, %67 : vector<4x256xf32>
    %69 = vector.broadcast %4 : vector<4x1xf32> to vector<4x256xf32>
    %70 = arith.addf %68, %69 : vector<4x256xf32>
    %cst_17 = arith.constant 0.000000e+00 : f32
    %71 = vector.broadcast %cst_17 : f32 to vector<4x256xf32>
    %72 = arith.maximumf %70, %71 : vector<4x256xf32>
    %cst_18 = arith.constant 0.000000e+00 : f32
    %73 = vector.broadcast %cst_18 : f32 to vector<4x17xf32>
    %74 = tpu.concatenate %73, %72, %73 in 1 : vector<4x17xf32>, vector<4x256xf32>, vector<4x17xf32> -> vector<4x290xf32>
    %75 = tpu.iota {dimensions = array<i32: 1>} : vector<1x256xi32>
    %c16_i32_19 = arith.constant 16 : i32
    %c0_i32_20 = arith.constant 0 : i32
    %76 = arith.cmpi eq, %c16_i32_19, %c0_i32_20 : i32
    %c1_i32_21 = arith.constant 1 : i32
    %77 = arith.select %76, %c1_i32_21, %c16_i32_19 : i32
    %78 = vector.broadcast %77 : i32 to vector<1x256xi32>
    %79 = arith.remsi %75, %78 : vector<1x256xi32>
    %c0_i32_22 = arith.constant 0 : i32
    %80 = vector.broadcast %c0_i32_22 : i32 to vector<1x256xi32>
    %81 = arith.cmpi ne, %79, %80 : vector<1x256xi32>
    %c0_i32_23 = arith.constant 0 : i32
    %82 = vector.broadcast %c0_i32_23 : i32 to vector<1x256xi32>
    %83 = arith.cmpi slt, %79, %82 : vector<1x256xi32>
    %c0_i32_24 = arith.constant 0 : i32
    %84 = arith.cmpi slt, %77, %c0_i32_24 : i32
    %85 = vector.broadcast %84 : i1 to vector<1x256xi1>
    %86 = vector.broadcast %85 : vector<1x256xi1> to vector<1x256xi1>
    %87 = arith.xori %83, %86 : vector<1x256xi1>
    %88 = arith.andi %87, %81 : vector<1x256xi1>
    %89 = vector.broadcast %77 : i32 to vector<1x256xi32>
    %90 = arith.addi %79, %89 : vector<1x256xi32>
    %91 = arith.select %88, %90, %79 : vector<1x256xi1>, vector<1x256xi32>
    %c1_i32_25 = arith.constant 1 : i32
    %92 = vector.broadcast %c1_i32_25 : i32 to vector<1x256xi32>
    %93 = arith.cmpi sge, %91, %92 : vector<1x256xi32>
    %c14_i32_26 = arith.constant 14 : i32
    %94 = vector.broadcast %c14_i32_26 : i32 to vector<1x256xi32>
    %95 = arith.cmpi sle, %91, %94 : vector<1x256xi32>
    %96 = vector.extract_strided_slice %74 {offsets = [0, 0], sizes = [4, 256], strides = [1, 1]} : vector<4x290xf32> to vector<4x256xf32>
    %cst_27 = arith.constant 0.000000e+00 : f32
    %97 = vector.shape_cast %93 : vector<1x256xi1> to vector<1x256xi1>
    %98 = vector.broadcast %97 : vector<1x256xi1> to vector<4x256xi1>
    %99 = vector.broadcast %cst_27 : f32 to vector<4x256xf32>
    %100 = arith.select %98, %96, %99 : vector<4x256xi1>, vector<4x256xf32>
    %101 = vector.extract_strided_slice %74 {offsets = [0, 1], sizes = [4, 256], strides = [1, 1]} : vector<4x290xf32> to vector<4x256xf32>
    %102 = vector.extract_strided_slice %74 {offsets = [0, 2], sizes = [4, 256], strides = [1, 1]} : vector<4x290xf32> to vector<4x256xf32>
    %cst_28 = arith.constant 0.000000e+00 : f32
    %103 = vector.shape_cast %95 : vector<1x256xi1> to vector<1x256xi1>
    %104 = vector.broadcast %103 : vector<1x256xi1> to vector<4x256xi1>
    %105 = vector.broadcast %cst_28 : f32 to vector<4x256xf32>
    %106 = arith.select %104, %102, %105 : vector<4x256xi1>, vector<4x256xf32>
    %107 = vector.extract_strided_slice %74 {offsets = [0, 16], sizes = [4, 256], strides = [1, 1]} : vector<4x290xf32> to vector<4x256xf32>
    %cst_29 = arith.constant 0.000000e+00 : f32
    %108 = vector.shape_cast %93 : vector<1x256xi1> to vector<1x256xi1>
    %109 = vector.broadcast %108 : vector<1x256xi1> to vector<4x256xi1>
    %110 = vector.broadcast %cst_29 : f32 to vector<4x256xf32>
    %111 = arith.select %109, %107, %110 : vector<4x256xi1>, vector<4x256xf32>
    %112 = vector.extract_strided_slice %74 {offsets = [0, 17], sizes = [4, 256], strides = [1, 1]} : vector<4x290xf32> to vector<4x256xf32>
    %113 = vector.extract_strided_slice %74 {offsets = [0, 18], sizes = [4, 256], strides = [1, 1]} : vector<4x290xf32> to vector<4x256xf32>
    %cst_30 = arith.constant 0.000000e+00 : f32
    %114 = vector.shape_cast %95 : vector<1x256xi1> to vector<1x256xi1>
    %115 = vector.broadcast %114 : vector<1x256xi1> to vector<4x256xi1>
    %116 = vector.broadcast %cst_30 : f32 to vector<4x256xf32>
    %117 = arith.select %115, %113, %116 : vector<4x256xi1>, vector<4x256xf32>
    %118 = vector.extract_strided_slice %74 {offsets = [0, 32], sizes = [4, 256], strides = [1, 1]} : vector<4x290xf32> to vector<4x256xf32>
    %cst_31 = arith.constant 0.000000e+00 : f32
    %119 = vector.shape_cast %93 : vector<1x256xi1> to vector<1x256xi1>
    %120 = vector.broadcast %119 : vector<1x256xi1> to vector<4x256xi1>
    %121 = vector.broadcast %cst_31 : f32 to vector<4x256xf32>
    %122 = arith.select %120, %118, %121 : vector<4x256xi1>, vector<4x256xf32>
    %123 = vector.extract_strided_slice %74 {offsets = [0, 33], sizes = [4, 256], strides = [1, 1]} : vector<4x290xf32> to vector<4x256xf32>
    %124 = vector.extract_strided_slice %74 {offsets = [0, 34], sizes = [4, 256], strides = [1, 1]} : vector<4x290xf32> to vector<4x256xf32>
    %cst_32 = arith.constant 0.000000e+00 : f32
    %125 = vector.shape_cast %95 : vector<1x256xi1> to vector<1x256xi1>
    %126 = vector.broadcast %125 : vector<1x256xi1> to vector<4x256xi1>
    %127 = vector.broadcast %cst_32 : f32 to vector<4x256xf32>
    %128 = arith.select %126, %124, %127 : vector<4x256xi1>, vector<4x256xf32>
    %129 = tpu.concatenate %100, %101, %106, %111, %112, %117, %122, %123, %128 in 0 : vector<4x256xf32>, vector<4x256xf32>, vector<4x256xf32>, vector<4x256xf32>, vector<4x256xf32>, vector<4x256xf32>, vector<4x256xf32>, vector<4x256xf32>, vector<4x256xf32> -> vector<36x256xf32>
    %130 = arith.truncf %129 : vector<36x256xf32> to vector<36x256xbf16>
    %c0_33 = arith.constant 0 : index
    %c0_34 = arith.constant 0 : index
    %131 = vector.load %arg3[%c0_33, %c0_34] : memref<4x36xbf16, #tpu.memory_space<vmem>>, vector<4x36xbf16>
    %cst_35 = arith.constant dense<0.000000e+00> : vector<4x256xf32>
    %132 = tpu.matmul %131, %130, %cst_35 {dimension_numbers = #tpu.dot_dimension_numbers<[1], [0], [0], [1], [0, 0, 1, 1], [], []>} : vector<4x36xbf16>, vector<36x256xbf16>, vector<4x256xf32> -> vector<4x256xf32>
    %133 = vector.broadcast %5 : vector<4x1xf32> to vector<4x256xf32>
    %134 = arith.mulf %132, %133 : vector<4x256xf32>
    %135 = vector.broadcast %6 : vector<4x1xf32> to vector<4x256xf32>
    %136 = arith.addf %134, %135 : vector<4x256xf32>
    %137 = arith.addf %1, %136 : vector<4x256xf32>
    %cst_36 = arith.constant 0.000000e+00 : f32
    %138 = vector.broadcast %cst_36 : f32 to vector<4x256xf32>
    %139 = arith.maximumf %137, %138 : vector<4x256xf32>
    %140 = vector.shape_cast %139 : vector<4x256xf32> to vector<1x4x256xf32>
    %c0_37 = arith.constant 0 : index
    %c0_38 = arith.constant 0 : index
    %c0_39 = arith.constant 0 : index
    %141 = vector.load %arg5[%c0_37, %c0_38, %c0_39] : memref<1x4x256xf32, #tpu.memory_space<vmem>>, vector<1x4x256xf32>
    tpu.vector_store %arg5[%c0_37, %c0_38, %c0_39], %140 {strides = array<i32>} : memref<1x4x256xf32, #tpu.memory_space<vmem>>, vector<1x4x256xf32>,
    return
  }
  func.func @transform_0(%arg0: i32) -> (i32, i32, i32) {
    %c0_i32 = arith.constant 0 : i32
    %c0_i32_0 = arith.constant 0 : i32
    %c0_i32_1 = arith.constant 0 : i32
    return %arg0, %c0_i32, %c0_i32_0 : i32, i32, i32
  }
  func.func @transform_1(%arg0: i32) -> (i32, i32) {
    %c0_i32 = arith.constant 0 : i32
    %c0_i32_0 = arith.constant 0 : i32
    %c0_i32_1 = arith.constant 0 : i32
    return %c0_i32, %c0_i32_0 : i32, i32
  }
  func.func @transform_2(%arg0: i32) -> (i32, i32) {
    %c0_i32 = arith.constant 0 : i32
    %c0_i32_0 = arith.constant 0 : i32
    %c0_i32_1 = arith.constant 0 : i32
    return %c0_i32, %c0_i32_0 : i32, i32
  }
  func.func @transform_3(%arg0: i32) -> (i32, i32) {
    %c0_i32 = arith.constant 0 : i32
    %c0_i32_0 = arith.constant 0 : i32
    %c0_i32_1 = arith.constant 0 : i32
    return %c0_i32, %c0_i32_0 : i32, i32
  }
  func.func @transform_4(%arg0: i32) -> (i32, i32, i32) {
    %c0_i32 = arith.constant 0 : i32
    %c0_i32_0 = arith.constant 0 : i32
    %c0_i32_1 = arith.constant 0 : i32
    return %arg0, %c0_i32, %c0_i32_0 : i32, i32, i32
  }
}

</mosaic_0001>

<llo_original>
// kernel: basic_block_forward.1
$region0: #{basic_block_forward.1}
  #allocation0 [shape = 'u32[]', space=smem, size = 0x4, offset = 0x4, fixed_abs, tag = 'smem constant byte address 0x4 - core index']
  #allocation1 [shape = 'u32[72,128]{1,0:T(1,128)}', space=vmem, size = 0x9000, scoped, tag = 'internal scratch']
  %s0 = inlined_call_operand.vmem [shape: f32[2,4,256], index: 0, kind: input, shape index: {}]
  %s1 = inlined_call_operand.vmem [shape: bf16[4,36], index: 1, kind: input, shape index: {}]
  %s2 = inlined_call_operand.vmem [shape: bf16[4,36], index: 2, kind: input, shape index: {}]
  %s3 = inlined_call_operand.vmem [shape: f32[4,4], index: 3, kind: input, shape index: {}]
  %s4 = inlined_call_operand.vmem [shape: f32[2,4,256], index: 4, kind: output, shape index: {}]
  %s5 = sld [smem:[#allocation0]]
  $region49: #{basic_block_forward.1} parent=0
    _
  %s7 = ssub.s32 1, %s5
  %s8 = scalar_select 0, %s7, %s5
  loop: start=0, step=1, limit=4
  $region2: #{basic_block_forward.1} parent=0 // loop_pre_header
    _
  $region3: #{basic_block_forward.1} parent=0 // loop_header
    %s10 = sphi 0, %s14
    %p11 = scmp.ge.s32.totalorder %s10, 4
    %s20 = sphi 0, %s22
    %s23 = sphi 0, %s20
    %s24 = sphi 0, %s23
    %s40 = sphi 0, %s24
    %s44 = sphi 0, %s44
    %s46 = sphi 0, %s44
    %s47 = sphi 0, %s46
    %s61 = sphi 0, %s47
    %s65 = sphi 0, %s65
    %s67 = sphi 0, %s65
    %s68 = sphi 0, %s67
    %s82 = sphi 0, %s68
    %s86 = sphi 0, %s86
    %s88 = sphi 0, %s86
    %s89 = sphi 0, %s88
    %s103 = sphi 0, %s89
    %s109 = sphi 0, %s111
    %s112 = sphi 0, %s109
    %s113 = sphi 0, %s112
    %s129 = sphi 0, %s113
  $region4: #{basic_block_forward.1} parent=0 // loop_header_branch
    %13 = sbr.rel (%p11) target = $region8
  $region5: #{basic_block_forward.1} parent=0 // loop_body
    %s15 = ssub.s32 %s10, 1
    %s16 = ssub.s32 %s10, 2
    %s17 = sadd.s32 %s10, 1
    %s18 = ssub.s32 %s10, %s17
    %p19 = scmp.eq.s32.totalorder %s18, 0
    %s21 = sadd.s32 %s20, 1
    %s22 = scalar_select %p19, %s20, %s21
    %p25 = pneg %p19
    %p26 = scmp.eq.s32.totalorder %s10, 1
    %p27 = por %p25, %p26
    %p28 = scmp.ne.s32.totalorder %s20, %s23
    %p29 = scmp.eq.s32.totalorder %s10, 0
    %p30 = por %p28, %p29
    %p31 = scmp.ne.s32.totalorder %s20, %s23
    %p32 = scmp.eq.s32.totalorder %s15, 1
    %p33 = por %p31, %p32
    %p34 = scmp.ne.s32.totalorder %s23, %s24
    %p35 = scmp.eq.s32.totalorder %s15, 0
    %p36 = por %p34, %p35
    %p37 = scmp.ne.s32.totalorder %s23, %s24
    %p38 = scmp.eq.s32.totalorder %s16, 1
    %p39 = por %p37, %p38
    %p41 = scmp.ne.s32.totalorder %s24, %s40
    %p42 = scmp.eq.s32.totalorder %s16, 0
    %p43 = por %p41, %p42
    %s45 = sadd.s32 %s44, 1
    %p48 = scmp.eq.s32.totalorder %s10, 1
    %p49 = scmp.ne.s32.totalorder %s44, %s46
    %p50 = scmp.eq.s32.totalorder %s10, 0
    %p51 = por %p49, %p50
    %p52 = scmp.ne.s32.totalorder %s44, %s46
    %p53 = scmp.eq.s32.totalorder %s15, 1
    %p54 = por %p52, %p53
    %p55 = scmp.ne.s32.totalorder %s46, %s47
    %p56 = scmp.eq.s32.totalorder %s15, 0
    %p57 = por %p55, %p56
    %p58 = scmp.ne.s32.totalorder %s46, %s47
    %p59 = scmp.eq.s32.totalorder %s16, 1
    %p60 = por %p58, %p59
    %p62 = scmp.ne.s32.totalorder %s47, %s61
    %p63 = scmp.eq.s32.totalorder %s16, 0
    %p64 = por %p62, %p63
    %s66 = sadd.s32 %s65, 1
    %p69 = scmp.eq.s32.totalorder %s10, 1
    %p70 = scmp.ne.s32.totalorder %s65, %s67
    %p71 = scmp.eq.s32.totalorder %s10, 0
    %p72 = por %p70, %p71
    %p73 = scmp.ne.s32.totalorder %s65, %s67
    %p74 = scmp.eq.s32.totalorder %s15, 1
    %p75 = por %p73, %p74
    %p76 = scmp.ne.s32.totalorder %s67, %s68
    %p77 = scmp.eq.s32.totalorder %s15, 0
    %p78 = por %p76, %p77
    %p79 = scmp.ne.s32.totalorder %s67, %s68
    %p80 = scmp.eq.s32.totalorder %s16, 1
    %p81 = por %p79, %p80
    %p83 = scmp.ne.s32.totalorder %s68, %s82
    %p84 = scmp.eq.s32.totalorder %s16, 0
    %p85 = por %p83, %p84
    %s87 = sadd.s32 %s86, 1
    %p90 = scmp.eq.s32.totalorder %s10, 1
    %p91 = scmp.ne.s32.totalorder %s86, %s88
    %p92 = scmp.eq.s32.totalorder %s10, 0
    %p93 = por %p91, %p92
    %p94 = scmp.ne.s32.totalorder %s86, %s88
    %p95 = scmp.eq.s32.totalorder %s15, 1
    %p96 = por %p94, %p95
    %p97 = scmp.ne.s32.totalorder %s88, %s89
    %p98 = scmp.eq.s32.totalorder %s15, 0
    %p99 = por %p97, %p98
    %p100 = scmp.ne.s32.totalorder %s88, %s89
    %p101 = scmp.eq.s32.totalorder %s16, 1
    %p102 = por %p100, %p101
    %p104 = scmp.ne.s32.totalorder %s89, %s103
    %p105 = scmp.eq.s32.totalorder %s16, 0
    %p106 = por %p104, %p105
    %s107 = ssub.s32 %s10, %s17
    %p108 = scmp.eq.s32.totalorder %s107, 0
    %s110 = sadd.s32 %s109, 1
    %s111 = scalar_select %p108, %s109, %s110
    %p114 = pneg %p108
    %p115 = scmp.eq.s32.totalorder %s10, 1
    %p116 = por %p114, %p115
    %p117 = scmp.ne.s32.totalorder %s109, %s112
    %p118 = scmp.eq.s32.totalorder %s10, 0
    %p119 = por %p117, %p118
    %p120 = scmp.ne.s32.totalorder %s109, %s112
    %p121 = scmp.eq.s32.totalorder %s15, 1
    %p122 = por %p120, %p121
    %p123 = scmp.ne.s32.totalorder %s112, %s113
    %p124 = scmp.eq.s32.totalorder %s15, 0
    %p125 = por %p123, %p124
    %p126 = scmp.ne.s32.totalorder %s112, %s113
    %p127 = scmp.eq.s32.totalorder %s16, 1
    %p128 = por %p126, %p127
    %p130 = scmp.ne.s32.totalorder %s113, %s129
    %p131 = scmp.eq.s32.totalorder %s16, 0
    %p132 = por %p130, %p131
    %p133 = scmp.le.s32.totalorder 1, %s10
    %p134 = scmp.lt.s32.totalorder %s10, 3
    %p135 = pnand %p133, %p134
    %p136 = pneg %p135
    // Predicated region
    $region9: #{basic_block_forward.1} parent=5 // pred_check
      _
    $region10: #{basic_block_forward.1} parent=5 // pred_check_branch
      %138 = sbr.rel (%p135) target = $region12
    $region11: #{basic_block_forward.1} parent=5 // pred_region
      %s139 = ssub.s32 %s10, 1
      // Predicated region
      $region13: #{basic_block_forward.1} parent=11 // pred_check
        %p140 = pneg %p57
      $region14: #{basic_block_forward.1} parent=11 // pred_check_branch
        %142 = sbr.rel (%p140) target = $region16
      $region15: #{basic_block_forward.1} parent=11 // pred_region
        _
      $region16: #{basic_block_forward.1} parent=11 // pred_fallthru
        _
      // Predicated region
      $region17: #{basic_block_forward.1} parent=11 // pred_check
        %p143 = pneg %p78
      $region18: #{basic_block_forward.1} parent=11 // pred_check_branch
        %145 = sbr.rel (%p143) target = $region20
      $region19: #{basic_block_forward.1} parent=11 // pred_region
        _
      $region20: #{basic_block_forward.1} parent=11 // pred_fallthru
        _
      // Predicated region
      $region21: #{basic_block_forward.1} parent=11 // pred_check
        %p146 = pneg %p99
      $region22: #{basic_block_forward.1} parent=11 // pred_check_branch
        %148 = sbr.rel (%p146) target = $region24
      $region23: #{basic_block_forward.1} parent=11 // pred_region
        _
      $region24: #{basic_block_forward.1} parent=11 // pred_fallthru
        _
    $region12: #{basic_block_forward.1} parent=5 // pred_fallthru
      _
    %p149 = scmp.lt.s32.totalorder %s10, 2
    // Predicated region
    $region25: #{basic_block_forward.1} parent=5 // pred_check
      %p150 = pneg %p149
    $region26: #{basic_block_forward.1} parent=5 // pred_check_branch
      %152 = sbr.rel (%p150) target = $region28
    $region27: #{basic_block_forward.1} parent=5 // pred_region
      // Predicated region
      $region29: #{basic_block_forward.1} parent=27 // pred_check
        %p153 = pneg %p30
      $region30: #{basic_block_forward.1} parent=27 // pred_check_branch
        %155 = sbr.rel (%p153) target = $region32
      $region31: #{basic_block_forward.1} parent=27 // pred_region
        %p156 = scmp.lt.s32.totalorder %s10, 1
        %s157 = scalar_select %p156, %s10, 1
        %s158 = smul.addr %s157, 2
        %s159 = smul.addr %s158, 4
        %s160 = scalar_lea.vmem %s0, %s159
      $region32: #{basic_block_forward.1} parent=27 // pred_fallthru
        _
    $region28: #{basic_block_forward.1} parent=5 // pred_fallthru
      _
    %p161 = scmp.le.s32.totalorder 1, %s10
    %p162 = scmp.lt.s32.totalorder %s10, 3
    %p163 = pnand %p161, %p162
    %p164 = pneg %p163
    // Predicated region
    $region33: #{basic_block_forward.1} parent=5 // pred_check
      _
    $region34: #{basic_block_forward.1} parent=5 // pred_check_branch
      %166 = sbr.rel (%p163) target = $region36
    $region35: #{basic_block_forward.1} parent=5 // pred_region
      %s167 = ssub.s32 %s10, 1
      %p168 = scmp.lt.s32.totalorder %s15, 1
      %s169 = scalar_select %p168, %s15, 1
      %s170 = smul.addr %s169, 2
      %s171 = smul.addr %s170, 4
      %s172 = scalar_lea.vmem %s0, %s171
      %p173 = pneg %p36
      %p174 = pneg %p33
      %p175 = pneg %p57
      %p176 = pneg %p54
      %p177 = pneg %p78
      %p178 = pneg %p75
      %p179 = pneg %p99
      %p180 = pneg %p96
      %p181 = pneg %p125
      %p182 = pneg %p122
      %p183 = scmp.lt.s32.totalorder %s15, 1
      %s184 = scalar_select %p183, %s15, 1
      %s185 = smul.addr %s184, 2
      %s186 = smul.addr %s185, 4
      %s187 = scalar_lea.vmem %s4, %s186
      %p188 = scmp.lt.s32.totalorder %s15, 1
      %s189 = scalar_select %p188, %s15, 1
      %s190 = smul.addr %s189, 2
      %s191 = smul.addr %s190, 4
      %s192 = scalar_lea.vmem %s0, %s191
      %p193 = scmp.lt.s32.totalorder %s15, 1
      %s194 = scalar_select %p193, %s15, 1
      %s195 = smul.addr %s194, 2
      %s196 = smul.addr %s195, 4
      %s197 = scalar_lea.vmem %s4, %s196
      %v199 = vld [vmem:[%s192] sm:$0xff]
      %v200 = vld [vmem:[%s3] sm:$0xf]
      %202 = vst [vmem:[#allocation1] ss:$2 sm:$0xff] %v199
      %v203 = vld.sshfl [vmem:[#allocation1] sm:$0xff pattern:$0x75316420]
      %v204 = vld.sshfl [vmem:[#allocation1 + $0x8] sm:$0xff pattern:$0x75316420]
      %205 = vrot.lane.b32.xlu0 %v203, 17
      %v206 = vpop.permute.xlu0 %205
      %207 = vrot.lane.b32.xlu0 %v204, 17
      %v208 = vpop.permute.xlu0 %207
      %vm209 = vcmask 138240
      %v210 = vsel %vm209, %v206, %v208
      %v214 = vsel %vm209, 0.0, %v206
      %v215 = vsel %vm209, %v208, 0.0
      %v216 = vlaneseq
      %v217 = vand.u32 %v216, 127
      %v218 = vadd.s32 %v217, 128
      %vm219 = vcmp.lt.s32.totalorder %v217, 0
      %v220 = vsub.s32 0, %v217
      %v221 = vsel %vm219, %v220, %v217
      %v222 = vshrl.u32 %v221, 4
      %v223 = vand.u32 %v221, 15
      %v224 = vsub.s32 0, %v223
      %v225 = vsel %vm219, %v224, %v223
      %vm226 = vcmp.lt.s32.totalorder %v218, 0
      %v227 = vsub.s32 0, %v218
      %v228 = vsel %vm226, %v227, %v218
      %v229 = vshrl.u32 %v228, 4
      %v230 = vand.u32 %v228, 15
      %v231 = vsub.s32 0, %v230
      %v232 = vsel %vm226, %v231, %v230
      %vm233 = vcmp.ne.s32.totalorder %v225, 0
      %vm234 = vcmp.ne.s32.totalorder %v232, 0
      %vm235 = vcmp.lt.s32.totalorder %v225, 0
      %vm236 = vcmp.lt.s32.totalorder %v232, 0
      %vm237 = vmand %vm235, %vm233
      %vm238 = vmand %vm236, %vm234
      %v239 = vadd.s32 %v225, 16
      %v240 = vadd.s32 %v232, 16
      %v241 = vsel %vm237, %v239, %v225
      %v242 = vsel %vm238, %v240, %v232
      %vm243 = vcmp.ge.s32.totalorder %v241, 1
      %vm244 = vcmp.ge.s32.totalorder %v242, 1
      %vm245 = vcmp.le.s32.totalorder %v241, 14
      %vm246 = vcmp.le.s32.totalorder %v242, 14
      %v247 = vsel %vm243, 1, 0
      %v248 = vsel %vm244, 1, 0
      %vm249 = vcmp.eq.s32.totalorder %v247, 1
      %vm250 = vcmp.eq.s32.totalorder %v248, 1
      %v251 = vsel %vm249, %v214, 0.0
      %v252 = vsel %vm250, %v210, 0.0
      %v253 = vsel %vm245, 1, 0
      %v254 = vsel %vm246, 1, 0
      %vm255 = vcmp.eq.s32.totalorder %v253, 1
      %vm256 = vcmp.eq.s32.totalorder %v254, 1
      %259 = vrot.lane.b32.xlu0 %v214, 126
      %v260 = vpop.permute.xlu0 %259
      %261 = vrot.lane.b32.xlu0 %v210, 126
      %v262 = vpop.permute.xlu0 %261
      %263 = vrot.lane.b32.xlu0 %v215, 126
      %v264 = vpop.permute.xlu0 %263
      %vm265 = vcmask 1031168
      %v266 = vsel %vm265, %v260, %v262
      %v267 = vsel %vm265, %v262, %v264
      %v270 = vsel %vm255, %v266, 0.0
      %v271 = vsel %vm256, %v267, 0.0
      %272 = vrot.lane.b32.xlu0 %v214, 112
      %v273 = vpop.permute.xlu0 %272
      %274 = vrot.lane.b32.xlu0 %v210, 112
      %v275 = vpop.permute.xlu0 %274
      %276 = vrot.lane.b32.xlu0 %v215, 112
      %v277 = vpop.permute.xlu0 %276
      %vm278 = vcmask 916480
      %v279 = vsel %vm278, %v273, %v275
      %v280 = vsel %vm278, %v275, %v277
      %v283 = vsel %vm249, %v279, 0.0
      %v284 = vsel %vm250, %v280, 0.0
      %285 = vrot.lane.b32.xlu0 %v214, 110
      %v286 = vpop.permute.xlu0 %285
      %287 = vrot.lane.b32.xlu0 %v210, 110
      %v288 = vpop.permute.xlu0 %287
      %289 = vrot.lane.b32.xlu0 %v215, 110
      %v290 = vpop.permute.xlu0 %289
      %vm291 = vcmask 900096
      %v292 = vsel %vm291, %v286, %v288
      %v293 = vsel %vm291, %v288, %v290
      %v296 = vsel %vm255, %v292, 0.0
      %v297 = vsel %vm256, %v293, 0.0
      %298 = vrot.lane.b32.xlu0 %v214, 96
      %v299 = vpop.permute.xlu0 %298
      %300 = vrot.lane.b32.xlu0 %v210, 96
      %v301 = vpop.permute.xlu0 %300
      %302 = vrot.lane.b32.xlu0 %v215, 96
      %v303 = vpop.permute.xlu0 %302
      %vm304 = vcmask 785408
      %v305 = vsel %vm304, %v299, %v301
      %v306 = vsel %vm304, %v301, %v303
      %v309 = vsel %vm249, %v305, 0.0
      %v310 = vsel %vm250, %v306, 0.0
      %311 = vrot.lane.b32.xlu0 %v214, 94
      %v312 = vpop.permute.xlu0 %311
      %313 = vrot.lane.b32.xlu0 %v210, 94
      %v314 = vpop.permute.xlu0 %313
      %315 = vrot.lane.b32.xlu0 %v215, 94
      %v316 = vpop.permute.xlu0 %315
      %vm317 = vcmask 769024
      %v318 = vsel %vm317, %v312, %v314
      %v319 = vsel %vm317, %v314, %v316
      %v322 = vsel %vm255, %v318, 0.0
      %v323 = vsel %vm256, %v319, 0.0
      %v324 = vrot.slane %v214, 4
      %v325 = vrot.slane %v210, 4
      %v326 = vrot.slane %v215, 4
      %327 = vrot.lane.b32.xlu0 %v324, 127
      %v328 = vpop.permute.xlu0 %327
      %329 = vrot.lane.b32.xlu0 %v325, 127
      %v330 = vpop.permute.xlu0 %329
      %331 = vrot.lane.b32.xlu0 %v326, 127
      %v332 = vpop.permute.xlu0 %331
      %vm333 = vcmask 1039360
      %v334 = vsel %vm333, %v328, %v330
      %v335 = vsel %vm333, %v330, %v332
      %v340 = vrot.slane %v283, 4
      %v341 = vrot.slane %v284, 4
      %344 = vrot.lane.b32.xlu0 %v214, 111
      %v345 = vpop.permute.xlu0 %344
      %346 = vrot.lane.b32.xlu0 %v210, 111
      %v347 = vpop.permute.xlu0 %346
      %348 = vrot.lane.b32.xlu0 %v215, 111
      %v349 = vpop.permute.xlu0 %348
      %vm350 = vcmask 908288
      %v351 = vsel %vm350, %v345, %v347
      %v352 = vsel %vm350, %v347, %v349
      %v357 = vrot.slane %v296, 4
      %v358 = vrot.slane %v297, 4
      %361 = vrot.lane.b32.xlu0 %v324, 95
      %v362 = vpop.permute.xlu0 %361
      %363 = vrot.lane.b32.xlu0 %v325, 95
      %v364 = vpop.permute.xlu0 %363
      %365 = vrot.lane.b32.xlu0 %v326, 95
      %v366 = vpop.permute.xlu0 %365
      %vm367 = vcmask 777216
      %v368 = vsel %vm367, %v362, %v364
      %v369 = vsel %vm367, %v364, %v366
      %vm372 = vcmask 1043456
      %v373 = vsel %vm372, %v251, %v334
      %v374 = vsel %vm372, %v252, %v335
      %v375 = vsel %vm372, %v270, %v340
      %v376 = vsel %vm372, %v271, %v341
      %v377 = vsel %vm372, %v351, %v357
      %v378 = vsel %vm372, %v352, %v358
      %v379 = vsel %vm372, %v309, %v368
      %v380 = vsel %vm372, %v310, %v369
      %v381 = vpack.c.bf16 %v375, %v373
      %v382 = vpack.c.bf16 %v376, %v374
      %v383 = vpack.c.bf16 %v379, %v377
      %v384 = vpack.c.bf16 %v380, %v378
      %v385 = vpack.c.bf16 %v322, %v322
      %v386 = vpack.c.bf16 %v323, %v323
      %v387 = vld [vmem:[%s1] sm:$0x3]
      %vm388 = vcmask 293888
      %v390 = vsel %vm388, %v387, 0
      %vm392 = vcmask 1041408
      %v394 = vsel %vm392, %v385, 0
      %v397 = vsel %vm392, %v386, 0
      %399 = vmatpush.bf16.msra.mxu0 0
      %400 = vmatpush.bf16.msra.mxu0 0
      %401 = vmatpush.bf16.msra.mxu0 0
      %402 = vmatpush.bf16.msra.mxu0 0
      %403 = vmatpush.bf16.msra.mxu0 0
      %404 = vmatpush.bf16.msra.mxu0 %v394
      %405 = vmatpush.bf16.msra.mxu0 %v383
      %406 = vmatpush.bf16.msra.mxu0 %v381
      %407 = vmatmul.bf16.gmra.mxu0 %v390
      %v408 = vpop.f32.mrf.mxu0
      %v409 = vadd.f32 0.0, %v408
      %v410 = vpop.f32.mrf.mxu0
      %411 = vdwg.mxu0
      %412 = vmatpush.bf16.msra.mxu0 0
      %413 = vmatpush.bf16.msra.mxu0 0
      %414 = vmatpush.bf16.msra.mxu0 0
      %415 = vmatpush.bf16.msra.mxu0 0
      %416 = vmatpush.bf16.msra.mxu0 0
      %417 = vmatpush.bf16.msra.mxu0 %v397
      %418 = vmatpush.bf16.msra.mxu0 %v384
      %419 = vmatpush.bf16.msra.mxu0 %v382
      %420 = vmatmul.bf16.gmra.mxu0 %v390
      %v421 = vpop.f32.mrf.mxu0
      %v422 = vadd.f32 0.0, %v421
      %v423 = vpop.f32.mrf.mxu0
      %424 = vdwg.mxu0
      %426 = vset.pattern.permute.xlu0 0
      %427 = vperm.xlu0 %426, %v200
      %v428 = vpop.permute.xlu0 %427
      %v430 = vmul.f32 %v409, %v428
      %v431 = vmul.f32 %v422, %v428
      %432 = vset.pattern.permute.xlu0 1
      %433 = vperm.xlu0 %432, %v200
      %v434 = vpop.permute.xlu0 %433
      %v436 = vadd.f32 %v430, %v434
      %v437 = vadd.f32 %v431, %v434
      %v438 = vmax.f32 %v436, 0.0
      %v439 = vmax.f32 %v437, 0.0
      %442 = vrot.lane.b32.xlu0 %v438, 17
      %v443 = vpop.permute.xlu0 %442
      %444 = vrot.lane.b32.xlu0 %v439, 17
      %v445 = vpop.permute.xlu0 %444
      %v446 = vsel %vm209, %v443, %v445
      %v450 = vsel %vm209, 0.0, %v443
      %v451 = vsel %vm209, %v445, 0.0
      %v452 = vsel %vm249, %v450, 0.0
      %v453 = vsel %vm250, %v446, 0.0
      %456 = vrot.lane.b32.xlu0 %v450, 126
      %v457 = vpop.permute.xlu0 %456
      %458 = vrot.lane.b32.xlu0 %v446, 126
      %v459 = vpop.permute.xlu0 %458
      %460 = vrot.lane.b32.xlu0 %v451, 126
      %v461 = vpop.permute.xlu0 %460
      %v462 = vsel %vm265, %v457, %v459
      %v463 = vsel %vm265, %v459, %v461
      %v466 = vsel %vm255, %v462, 0.0
      %v467 = vsel %vm256, %v463, 0.0
      %468 = vrot.lane.b32.xlu0 %v450, 112
      %v469 = vpop.permute.xlu0 %468
      %470 = vrot.lane.b32.xlu0 %v446, 112
      %v471 = vpop.permute.xlu0 %470
      %472 = vrot.lane.b32.xlu0 %v451, 112
      %v473 = vpop.permute.xlu0 %472
      %v474 = vsel %vm278, %v469, %v471
      %v475 = vsel %vm278, %v471, %v473
      %v478 = vsel %vm249, %v474, 0.0
      %v479 = vsel %vm250, %v475, 0.0
      %480 = vrot.lane.b32.xlu0 %v450, 110
      %v481 = vpop.permute.xlu0 %480
      %482 = vrot.lane.b32.xlu0 %v446, 110
      %v483 = vpop.permute.xlu0 %482
      %484 = vrot.lane.b32.xlu0 %v451, 110
      %v485 = vpop.permute.xlu0 %484
      %v486 = vsel %vm291, %v481, %v483
      %v487 = vsel %vm291, %v483, %v485
      %v490 = vsel %vm255, %v486, 0.0
      %v491 = vsel %vm256, %v487, 0.0
      %492 = vrot.lane.b32.xlu0 %v450, 96
      %v493 = vpop.permute.xlu0 %492
      %494 = vrot.lane.b32.xlu0 %v446, 96
      %v495 = vpop.permute.xlu0 %494
      %496 = vrot.lane.b32.xlu0 %v451, 96
      %v497 = vpop.permute.xlu0 %496
      %v498 = vsel %vm304, %v493, %v495
      %v499 = vsel %vm304, %v495, %v497
      %v502 = vsel %vm249, %v498, 0.0
      %v503 = vsel %vm250, %v499, 0.0
      %504 = vrot.lane.b32.xlu0 %v450, 94
      %v505 = vpop.permute.xlu0 %504
      %506 = vrot.lane.b32.xlu0 %v446, 94
      %v507 = vpop.permute.xlu0 %506
      %508 = vrot.lane.b32.xlu0 %v451, 94
      %v509 = vpop.permute.xlu0 %508
      %v510 = vsel %vm317, %v505, %v507
      %v511 = vsel %vm317, %v507, %v509
      %v514 = vsel %vm255, %v510, 0.0
      %v515 = vsel %vm256, %v511, 0.0
      %v516 = vrot.slane %v450, 4
      %v517 = vrot.slane %v446, 4
      %v518 = vrot.slane %v451, 4
      %519 = vrot.lane.b32.xlu0 %v516, 127
      %v520 = vpop.permute.xlu0 %519
      %521 = vrot.lane.b32.xlu0 %v517, 127
      %v522 = vpop.permute.xlu0 %521
      %523 = vrot.lane.b32.xlu0 %v518, 127
      %v524 = vpop.permute.xlu0 %523
      %v525 = vsel %vm333, %v520, %v522
      %v526 = vsel %vm333, %v522, %v524
      %v531 = vrot.slane %v478, 4
      %v532 = vrot.slane %v479, 4
      %535 = vrot.lane.b32.xlu0 %v450, 111
      %v536 = vpop.permute.xlu0 %535
      %537 = vrot.lane.b32.xlu0 %v446, 111
      %v538 = vpop.permute.xlu0 %537
      %539 = vrot.lane.b32.xlu0 %v451, 111
      %v540 = vpop.permute.xlu0 %539
      %v541 = vsel %vm350, %v536, %v538
      %v542 = vsel %vm350, %v538, %v540
      %v547 = vrot.slane %v490, 4
      %v548 = vrot.slane %v491, 4
      %551 = vrot.lane.b32.xlu0 %v516, 95
      %v552 = vpop.permute.xlu0 %551
      %553 = vrot.lane.b32.xlu0 %v517, 95
      %v554 = vpop.permute.xlu0 %553
      %555 = vrot.lane.b32.xlu0 %v518, 95
      %v556 = vpop.permute.xlu0 %555
      %v557 = vsel %vm367, %v552, %v554
      %v558 = vsel %vm367, %v554, %v556
      %v561 = vsel %vm372, %v452, %v525
      %v562 = vsel %vm372, %v453, %v526
      %v563 = vsel %vm372, %v466, %v531
      %v564 = vsel %vm372, %v467, %v532
      %v565 = vsel %vm372, %v541, %v547
      %v566 = vsel %vm372, %v542, %v548
      %v567 = vsel %vm372, %v502, %v557
      %v568 = vsel %vm372, %v503, %v558
      %v569 = vpack.c.bf16 %v563, %v561
      %v570 = vpack.c.bf16 %v564, %v562
      %v571 = vpack.c.bf16 %v567, %v565
      %v572 = vpack.c.bf16 %v568, %v566
      %v573 = vpack.c.bf16 %v514, %v514
      %v574 = vpack.c.bf16 %v515, %v515
      %v575 = vld [vmem:[%s2] sm:$0x3]
      %v577 = vsel %vm388, %v575, 0
      %v580 = vsel %vm392, %v573, 0
      %v583 = vsel %vm392, %v574, 0
      %585 = vmatpush.bf16.msra.mxu0 0
      %586 = vmatpush.bf16.msra.mxu0 0
      %587 = vmatpush.bf16.msra.mxu0 0
      %588 = vmatpush.bf16.msra.mxu0 0
      %589 = vmatpush.bf16.msra.mxu0 0
      %590 = vmatpush.bf16.msra.mxu0 %v580
      %591 = vmatpush.bf16.msra.mxu0 %v571
      %592 = vmatpush.bf16.msra.mxu0 %v569
      %593 = vmatmul.bf16.gmra.mxu0 %v577
      %v594 = vpop.f32.mrf.mxu0
      %v595 = vadd.f32 0.0, %v594
      %v596 = vpop.f32.mrf.mxu0
      %597 = vdwg.mxu0
      %598 = vmatpush.bf16.msra.mxu0 0
      %599 = vmatpush.bf16.msra.mxu0 0
      %600 = vmatpush.bf16.msra.mxu0 0
      %601 = vmatpush.bf16.msra.mxu0 0
      %602 = vmatpush.bf16.msra.mxu0 0
      %603 = vmatpush.bf16.msra.mxu0 %v583
      %604 = vmatpush.bf16.msra.mxu0 %v572
      %605 = vmatpush.bf16.msra.mxu0 %v570
      %606 = vmatmul.bf16.gmra.mxu0 %v577
      %v607 = vpop.f32.mrf.mxu0
      %v608 = vadd.f32 0.0, %v607
      %v609 = vpop.f32.mrf.mxu0
      %610 = vdwg.mxu0
      %611 = vset.pattern.permute.xlu0 2
      %612 = vperm.xlu0 %611, %v200
      %v613 = vpop.permute.xlu0 %612
      %v615 = vmul.f32 %v595, %v613
      %v616 = vmul.f32 %v608, %v613
      %617 = vset.pattern.permute.xlu0 3
      %618 = vperm.xlu0 %617, %v200
      %v619 = vpop.permute.xlu0 %618
      %v621 = vadd.f32 %v615, %v619
      %v622 = vadd.f32 %v616, %v619
      %v625 = vrot.slane %v622, 4
      %v626 = vsel %vm372, %v621, %v625
      %v628 = vadd.f32 %v199, %v626
      %v629 = vmax.f32 %v628, 0.0
      %630 = vst [vmem:[%s197] sm:$0xff] %v629
      %p631 = scmp.lt.s32.totalorder %s15, 1
      %s632 = scalar_select %p631, %s15, 1
      %s633 = smul.addr %s632, 2
      %s634 = smul.addr %s633, 4
      %s635 = scalar_lea.vmem %s4, %s634
      // Predicated region
      $region37: #{basic_block_forward.1} parent=35 // pred_check
        %p636 = pneg %p122
      $region38: #{basic_block_forward.1} parent=35 // pred_check_branch
        %638 = sbr.rel (%p636) target = $region40
      $region39: #{basic_block_forward.1} parent=35 // pred_region
        _
      $region40: #{basic_block_forward.1} parent=35 // pred_fallthru
        _
    $region36: #{basic_block_forward.1} parent=5 // pred_fallthru
      _
    %p639 = scmp.le.s32.totalorder 2, %s10
    // Predicated region
    $region41: #{basic_block_forward.1} parent=5 // pred_check
      %p640 = pneg %p639
    $region42: #{basic_block_forward.1} parent=5 // pred_check_branch
      %642 = sbr.rel (%p640) target = $region44
    $region43: #{basic_block_forward.1} parent=5 // pred_region
      %s643 = ssub.s32 %s10, 2
      // Predicated region
      $region45: #{basic_block_forward.1} parent=43 // pred_check
        %p644 = pneg %p128
      $region46: #{basic_block_forward.1} parent=43 // pred_check_branch
        %646 = sbr.rel (%p644) target = $region48
      $region47: #{basic_block_forward.1} parent=43 // pred_region
        %p647 = scmp.lt.s32.totalorder %s16, 1
        %s648 = scalar_select %p647, %s16, 1
        %s649 = smul.addr %s648, 2
        %s650 = smul.addr %s649, 4
        %s651 = scalar_lea.vmem %s4, %s650
      $region48: #{basic_block_forward.1} parent=43 // pred_fallthru
        _
    $region44: #{basic_block_forward.1} parent=5 // pred_fallthru
      _
  $region6: #{basic_block_forward.1} parent=0 // loop_footer
    %s14 = sadd.s32 1, %s10
  $region7: #{basic_block_forward.1} parent=0 // loop_footer_branch
    %9 = sbr.rel target = $region3
  $region8: #{basic_block_forward.1} parent=0 // loop_exit
    _

</llo_original>
